<compile_context>
chip_gen: v7x
topology: tpu7x:2x2x1
jax: 0.10.0
libtpu: 0.0.40
codegen_flags: <defaults>
</compile_context>

<pallas_src>
import jax
import jax.numpy as jnp
from jax.experimental import pallas as pl
from jax.experimental.pallas import tpu as pltpu

INPUT_SIZE = 6
HIDDEN_SIZE = 200
OUTPUT_SIZE = 1

IN_PAD = 8          # 6 -> 8 sublanes
HID_PAD = 256       # 200 -> 256 lanes (lane-aligned hidden dim)
BATCH_TILE = 256    # batch lanes per grid step (multiple of 128). Tiny vs VMEM on
                    # v5e/v6e (128 MiB) and v7x (64 MiB), so no vmem_limit override needed.


def _ff_kernel(x_ref, w1_ref, b1_ref, w2_ref, b2_ref, o_ref):
    # x_ref:  [IN_PAD, TB]       batch on lanes
    # w1_ref: [HID_PAD, IN_PAD]  VMEM-resident (constant block index across grid)
    # b1_ref: [HID_PAD, 1]
    # w2_ref: [1, HID_PAD]
    # b2_ref: [1, 1]
    # o_ref:  [1, TB]            lane-dense output tile
    h = jnp.dot(w1_ref[...], x_ref[...], preferred_element_type=jnp.float32)  # [HID_PAD, TB]
    h = jax.nn.sigmoid(h + b1_ref[...])          # exp on EUP, no f32 divide on the VALU
    out = jnp.dot(w2_ref[...], h, preferred_element_type=jnp.float32)         # [1, TB]
    o_ref[...] = (out + b2_ref[...]).astype(o_ref.dtype)


def action_conditioned_ff(x, w1, b1, w2, b2):
    """Forward pass matching the PyTorch module.

    x:  [B, 6]    float32
    w1: [200, 6]  (PyTorch nn.Linear convention: [out_features, in_features])
    b1: [200]
    w2: [1, 200]
    b2: [1]
    returns [B, 1] float32
    """
    B = x.shape[0]
    Bp = pl.cdiv(B, BATCH_TILE) * BATCH_TILE
    num_tiles = Bp // BATCH_TILE

    # Batch-on-lane layout: x^T zero-padded to [IN_PAD, Bp].
    x_t = jnp.zeros((IN_PAD, Bp), jnp.float32).at[:INPUT_SIZE, :B].set(x.T)

    # Zero-padded weights (padding never contributes to the real outputs).
    w1_p = jnp.zeros((HID_PAD, IN_PAD), jnp.float32).at[:HIDDEN_SIZE, :INPUT_SIZE].set(w1)
    b1_p = jnp.zeros((HID_PAD, 1), jnp.float32).at[:HIDDEN_SIZE, 0].set(b1)
    w2_p = jnp.zeros((OUTPUT_SIZE, HID_PAD), jnp.float32).at[:, :HIDDEN_SIZE].set(w2)
    b2_p = b2.reshape(1, 1).astype(jnp.float32)

    const = lambda shape: pl.BlockSpec(shape, lambda i: (0, 0))  # stays VMEM-resident

    out_t = pl.pallas_call(
        _ff_kernel,
        out_shape=jax.ShapeDtypeStruct((OUTPUT_SIZE, Bp), jnp.float32),
        grid=(num_tiles,),
        in_specs=[
            pl.BlockSpec((IN_PAD, BATCH_TILE), lambda i: (0, i)),   # x tile (pipelined)
            const((HID_PAD, IN_PAD)),
            const((HID_PAD, 1)),
            const((OUTPUT_SIZE, HID_PAD)),
            const((OUTPUT_SIZE, OUTPUT_SIZE)),
        ],
        out_specs=pl.BlockSpec((OUTPUT_SIZE, BATCH_TILE), lambda i: (0, i)),
        compiler_params=pltpu.CompilerParams(
            dimension_semantics=("parallel",),   # shard batch tiles across TCs on v7x
        ),
    )(x_t, w1_p, b1_p, w2_p, b2_p)

    # [1, Bp] lane-dense slab -> [B, 1]
    return out_t.reshape(Bp, OUTPUT_SIZE)[:B]


def init_params(key):
    """Deterministic init mimicking nn.Linear default (U[-1/sqrt(fan_in), 1/sqrt(fan_in)]).

    Weights follow the PyTorch [out_features, in_features] convention.
    """
    k1, k2, k3, k4 = jax.random.split(key, 4)
    bound1 = 1.0 / jnp.sqrt(jnp.float32(INPUT_SIZE))
    bound2 = 1.0 / jnp.sqrt(jnp.float32(HIDDEN_SIZE))
    w1 = jax.random.uniform(k1, (HIDDEN_SIZE, INPUT_SIZE), jnp.float32, -bound1, bound1)
    b1 = jax.random.uniform(k2, (HIDDEN_SIZE,), jnp.float32, -bound1, bound1)
    w2 = jax.random.uniform(k3, (OUTPUT_SIZE, HIDDEN_SIZE), jnp.float32, -bound2, bound2)
    b2 = jax.random.uniform(k4, (OUTPUT_SIZE,), jnp.float32, -bound2, bound2)
    return w1, b1, w2, b2


if __name__ == "__main__":
    key = jax.random.PRNGKey(0)
    pkey, xkey = jax.random.split(key)
    w1, b1, w2, b2 = init_params(pkey)

    # Note: at B this small a standalone pallas_call is launch-overhead dominated;
    # the kernel is written for (and pays off at) large batches, which the batch grid
    # + parallel semantics handle by streaming lane-dense tiles.
    batch = 8
    x = jax.random.normal(xkey, (batch, INPUT_SIZE), jnp.float32)

    out = action_conditioned_ff(x, w1, b1, w2, b2)
    out = jax.block_until_ready(out)

    # Pure-JAX reference of the PyTorch forward semantics.
    h_ref = jax.nn.sigmoid(x @ w1.T + b1)
    ref = h_ref @ w2.T + b2
    assert out.shape == (batch, OUTPUT_SIZE)
    assert jnp.allclose(out, ref, atol=1e-5, rtol=1e-5)

    print("KERNEL_OK")
</pallas_src>

<mosaic_0001>
module attributes {stable_mosaic.version = 11 : i64} {
  func.func @_ff_kernel(%arg0: i32, %arg1: memref<8x256xf32, #tpu.memory_space<vmem>>, %arg2: memref<256x8xf32, #tpu.memory_space<vmem>>, %arg3: memref<256x1xf32, #tpu.memory_space<vmem>>, %arg4: memref<1x256xf32, #tpu.memory_space<vmem>>, %arg5: memref<1x1xf32, #tpu.memory_space<vmem>>, %arg6: memref<1x256xf32, #tpu.memory_space<vmem>>) attributes {dimension_semantics = [#tpu.dimension_semantics<parallel>], iteration_bounds = array<i64: 1>, scalar_prefetch = 0 : i64, scratch_operands = 0 : i64, tpu.core_type = #tpu.core_type<tc>, window_params = [{transform_indices = @transform_0, window_bounds = array<i64: 8, 256>}, {pipeline_mode = #tpu.pipeline_mode<synchronous>, transform_indices = @transform_1, window_bounds = array<i64: 256, 8>}, {pipeline_mode = #tpu.pipeline_mode<synchronous>, transform_indices = @transform_2, window_bounds = array<i64: 256, 1>}, {pipeline_mode = #tpu.pipeline_mode<synchronous>, transform_indices = @transform_3, window_bounds = array<i64: 1, 256>}, {pipeline_mode = #tpu.pipeline_mode<synchronous>, transform_indices = @transform_4, window_bounds = array<i64: 1, 1>}, {transform_indices = @transform_5, window_bounds = array<i64: 1, 256>}]} {
    %c0 = arith.constant 0 : index
    %c0_0 = arith.constant 0 : index
    %0 = vector.load %arg2[%c0, %c0_0] : memref<256x8xf32, #tpu.memory_space<vmem>>, vector<256x8xf32>
    %c0_1 = arith.constant 0 : index
    %c0_2 = arith.constant 0 : index
    %1 = vector.load %arg1[%c0_1, %c0_2] : memref<8x256xf32, #tpu.memory_space<vmem>>, vector<8x256xf32>
    %cst = arith.constant dense<0.000000e+00> : vector<256x256xf32>
    %2 = tpu.matmul %0, %1, %cst {dimension_numbers = #tpu.dot_dimension_numbers<[1], [0], [0], [1], [0, 0, 1, 1], [], []>} : vector<256x8xf32>, vector<8x256xf32>, vector<256x256xf32> -> vector<256x256xf32>
    %c0_3 = arith.constant 0 : index
    %c0_4 = arith.constant 0 : index
    %3 = vector.load %arg3[%c0_3, %c0_4] : memref<256x1xf32, #tpu.memory_space<vmem>>, vector<256x1xf32>
    %4 = vector.broadcast %3 : vector<256x1xf32> to vector<256x256xf32>
    %5 = arith.addf %2, %4 : vector<256x256xf32>
    %6 = arith.negf %5 : vector<256x256xf32>
    %7 = math.exp %6 : vector<256x256xf32>
    %cst_5 = arith.constant 1.000000e+00 : f32
    %8 = vector.broadcast %cst_5 : f32 to vector<256x256xf32>
    %9 = arith.addf %8, %7 : vector<256x256xf32>
    %10 = arith.divf %8, %9 : vector<256x256xf32>
    %c0_6 = arith.constant 0 : index
    %c0_7 = arith.constant 0 : index
    %11 = vector.load %arg4[%c0_6, %c0_7] : memref<1x256xf32, #tpu.memory_space<vmem>>, vector<1x256xf32>
    %cst_8 = arith.constant dense<0.000000e+00> : vector<1x256xf32>
    %12 = tpu.matmul %11, %10, %cst_8 {dimension_numbers = #tpu.dot_dimension_numbers<[1], [0], [0], [1], [0, 0, 1, 1], [], []>} : vector<1x256xf32>, vector<256x256xf32>, vector<1x256xf32> -> vector<1x256xf32>
    %c0_9 = arith.constant 0 : index
    %c0_10 = arith.constant 0 : index
    %13 = vector.load %arg5[%c0_9, %c0_10] : memref<1x1xf32, #tpu.memory_space<vmem>>, vector<1x1xf32>
    %14 = vector.broadcast %13 : vector<1x1xf32> to vector<1x256xf32>
    %15 = arith.addf %12, %14 : vector<1x256xf32>
    %c0_11 = arith.constant 0 : index
    %c0_12 = arith.constant 0 : index
    %16 = vector.load %arg6[%c0_11, %c0_12] : memref<1x256xf32, #tpu.memory_space<vmem>>, vector<1x256xf32>
    tpu.vector_store %arg6[%c0_11, %c0_12], %15 {strides = array<i32>} : memref<1x256xf32, #tpu.memory_space<vmem>>, vector<1x256xf32>,
    return
  }
  func.func @transform_0(%arg0: i32) -> (i32, i32) {
    %c0_i32 = arith.constant 0 : i32
    %c0_i32_0 = arith.constant 0 : i32
    return %c0_i32, %arg0 : i32, i32
  }
  func.func @transform_1(%arg0: i32) -> (i32, i32) {
    %c0_i32 = arith.constant 0 : i32
    %c0_i32_0 = arith.constant 0 : i32
    %c0_i32_1 = arith.constant 0 : i32
    return %c0_i32, %c0_i32_0 : i32, i32
  }
  func.func @transform_2(%arg0: i32) -> (i32, i32) {
    %c0_i32 = arith.constant 0 : i32
    %c0_i32_0 = arith.constant 0 : i32
    %c0_i32_1 = arith.constant 0 : i32
    return %c0_i32, %c0_i32_0 : i32, i32
  }
  func.func @transform_3(%arg0: i32) -> (i32, i32) {
    %c0_i32 = arith.constant 0 : i32
    %c0_i32_0 = arith.constant 0 : i32
    %c0_i32_1 = arith.constant 0 : i32
    return %c0_i32, %c0_i32_0 : i32, i32
  }
  func.func @transform_4(%arg0: i32) -> (i32, i32) {
    %c0_i32 = arith.constant 0 : i32
    %c0_i32_0 = arith.constant 0 : i32
    %c0_i32_1 = arith.constant 0 : i32
    return %c0_i32, %c0_i32_0 : i32, i32
  }
  func.func @transform_5(%arg0: i32) -> (i32, i32) {
    %c0_i32 = arith.constant 0 : i32
    %c0_i32_0 = arith.constant 0 : i32
    return %c0_i32, %arg0 : i32, i32
  }
}

</mosaic_0001>

<llo_original>
// kernel: tpu_custom_call.1
$region0: #{tpu_custom_call.1}
  #allocation0 [shape = 'u32[]', space=smem, size = 0x4, offset = 0x4, fixed_abs, tag = 'smem constant byte address 0x4 - core index']
  #allocation1 [shape = 'u32[144,128]{1,0:T(1,128)}', space=vmem, size = 0x12000, scoped, tag = 'internal scratch']
  #allocation2 [shape = 'f32[1,1]{1,0:T(1,128)S(1)}', space=vmem, size = 0x200, scoped, tag = 'scoped memory for tpu_custom_call.1']
  %s0 = inlined_call_operand.vmem [shape: f32[8,256], index: 0, kind: input, shape index: {}]
  %s1 = inlined_call_operand.vmem [shape: f32[256,8], index: 1, kind: input, shape index: {}]
  %s2 = inlined_call_operand.vmem [shape: f32[256,1], index: 2, kind: input, shape index: {}]
  %s3 = inlined_call_operand.vmem [shape: f32[1,256], index: 3, kind: input, shape index: {}]
  %s4 = inlined_call_operand.<no memory space> [shape: f32[1,1], index: 4, kind: input, shape index: {}]
  %s5 = inlined_call_operand.hbm [shape: f32[1,256], index: 5, kind: output, shape index: {}]
  %s6 = sld [smem:[#allocation0]]
  $region30: #{tpu_custom_call.1} parent=0
    _
  %s8 = ssub.s32 1, %s6
  %s9 = scalar_select 0, %s8, %s6
  %v10 = vstv %s4
  %11 = vst [vmem:[#allocation2] sm:$0x1] %v10
  $region1: #{tpu_custom_call.1} parent=0
    #allocation3 [shape = 'u8[1024]{0}', space=vmem, size = 0x400, scoped, tag = 'output window, operand 0, single buffered']
    #allocation4 [shape = 's32[1]{0}', space=sflag, size = 0x4, scoped, tag = 'scoped memory for tpu_custom_call.1']
    %12 = vsyncpa [#allocation4], 0
    // Predicated region
    $region2: #{tpu_custom_call.1} parent=1 // pred_check
      _
    $region3: #{tpu_custom_call.1} parent=1 // pred_check_branch
      %14 = sbr.rel (0) target = $region5
    $region4: #{tpu_custom_call.1} parent=1 // pred_region
      _
    $region5: #{tpu_custom_call.1} parent=1 // pred_fallthru
      _
    // Predicated region
    $region6: #{tpu_custom_call.1} parent=1 // pred_check
      _
    $region7: #{tpu_custom_call.1} parent=1 // pred_check_branch
      %16 = sbr.rel (0) target = $region9
    $region8: #{tpu_custom_call.1} parent=1 // pred_region
      _
    $region9: #{tpu_custom_call.1} parent=1 // pred_fallthru
      _
    // Predicated region
    $region10: #{tpu_custom_call.1} parent=1 // pred_check
      _
    $region11: #{tpu_custom_call.1} parent=1 // pred_check_branch
      %18 = sbr.rel (0) target = $region13
    $region12: #{tpu_custom_call.1} parent=1 // pred_region
      _
    $region13: #{tpu_custom_call.1} parent=1 // pred_fallthru
      _
    // Predicated region
    $region14: #{tpu_custom_call.1} parent=1 // pred_check
      _
    $region15: #{tpu_custom_call.1} parent=1 // pred_check_branch
      %20 = sbr.rel (0) target = $region17
    $region16: #{tpu_custom_call.1} parent=1 // pred_region
      _
    $region17: #{tpu_custom_call.1} parent=1 // pred_fallthru
      _
    // Predicated region
    $region18: #{tpu_custom_call.1} parent=1 // pred_check
      _
    $region19: #{tpu_custom_call.1} parent=1 // pred_check_branch
      %22 = sbr.rel (0) target = $region21
    $region20: #{tpu_custom_call.1} parent=1 // pred_region
      _
    $region21: #{tpu_custom_call.1} parent=1 // pred_fallthru
      _
    %v23 = vld [vmem:[%s1] sm:$0xff]
    %v24 = vld [vmem:[%s1 + $0x8] sm:$0xff]
    %v25 = vld [vmem:[%s1 + $0x10] sm:$0xff]
    %v26 = vld [vmem:[%s1 + $0x18] sm:$0xff]
    %v27 = vld [vmem:[%s1 + $0x20] sm:$0xff]
    %v28 = vld [vmem:[%s1 + $0x28] sm:$0xff]
    %v29 = vld [vmem:[%s1 + $0x30] sm:$0xff]
    %v30 = vld [vmem:[%s1 + $0x38] sm:$0xff]
    %v31 = vld [vmem:[%s1 + $0x40] sm:$0xff]
    %v32 = vld [vmem:[%s1 + $0x48] sm:$0xff]
    %v33 = vld [vmem:[%s1 + $0x50] sm:$0xff]
    %v34 = vld [vmem:[%s1 + $0x58] sm:$0xff]
    %v35 = vld [vmem:[%s1 + $0x60] sm:$0xff]
    %v36 = vld [vmem:[%s1 + $0x68] sm:$0xff]
    %v37 = vld [vmem:[%s1 + $0x70] sm:$0xff]
    %v38 = vld [vmem:[%s1 + $0x78] sm:$0xff]
    %v39 = vld [vmem:[%s1 + $0x80] sm:$0xff]
    %v40 = vld [vmem:[%s1 + $0x88] sm:$0xff]
    %v41 = vld [vmem:[%s1 + $0x90] sm:$0xff]
    %v42 = vld [vmem:[%s1 + $0x98] sm:$0xff]
    %v43 = vld [vmem:[%s1 + $0xa0] sm:$0xff]
    %v44 = vld [vmem:[%s1 + $0xa8] sm:$0xff]
    %v45 = vld [vmem:[%s1 + $0xb0] sm:$0xff]
    %v46 = vld [vmem:[%s1 + $0xb8] sm:$0xff]
    %v47 = vld [vmem:[%s1 + $0xc0] sm:$0xff]
    %v48 = vld [vmem:[%s1 + $0xc8] sm:$0xff]
    %v49 = vld [vmem:[%s1 + $0xd0] sm:$0xff]
    %v50 = vld [vmem:[%s1 + $0xd8] sm:$0xff]
    %v51 = vld [vmem:[%s1 + $0xe0] sm:$0xff]
    %v52 = vld [vmem:[%s1 + $0xe8] sm:$0xff]
    %v53 = vld [vmem:[%s1 + $0xf0] sm:$0xff]
    %v54 = vld [vmem:[%s1 + $0xf8] sm:$0xff]
    %v55 = vld [vmem:[%s0] sm:$0xff]
    %v56 = vld [vmem:[%s0 + $0x8] sm:$0xff]
    %v57 = vld [vmem:[%s2] sm:$0xff]
    %v58 = vld [vmem:[%s2 + $0x8] sm:$0xff]
    %v59 = vld [vmem:[%s2 + $0x10] sm:$0xff]
    %v60 = vld [vmem:[%s2 + $0x18] sm:$0xff]
    %v61 = vld [vmem:[%s2 + $0x20] sm:$0xff]
    %v62 = vld [vmem:[%s2 + $0x28] sm:$0xff]
    %v63 = vld [vmem:[%s2 + $0x30] sm:$0xff]
    %v64 = vld [vmem:[%s2 + $0x38] sm:$0xff]
    %v65 = vld [vmem:[%s2 + $0x40] sm:$0xff]
    %v66 = vld [vmem:[%s2 + $0x48] sm:$0xff]
    %v67 = vld [vmem:[%s2 + $0x50] sm:$0xff]
    %v68 = vld [vmem:[%s2 + $0x58] sm:$0xff]
    %v69 = vld [vmem:[%s2 + $0x60] sm:$0xff]
    %v70 = vld [vmem:[%s2 + $0x68] sm:$0xff]
    %v71 = vld [vmem:[%s2 + $0x70] sm:$0xff]
    %v72 = vld [vmem:[%s2 + $0x78] sm:$0xff]
    %v73 = vld [vmem:[%s2 + $0x80] sm:$0xff]
    %v74 = vld [vmem:[%s2 + $0x88] sm:$0xff]
    %v75 = vld [vmem:[%s2 + $0x90] sm:$0xff]
    %v76 = vld [vmem:[%s2 + $0x98] sm:$0xff]
    %v77 = vld [vmem:[%s2 + $0xa0] sm:$0xff]
    %v78 = vld [vmem:[%s2 + $0xa8] sm:$0xff]
    %v79 = vld [vmem:[%s2 + $0xb0] sm:$0xff]
    %v80 = vld [vmem:[%s2 + $0xb8] sm:$0xff]
    %v81 = vld [vmem:[%s2 + $0xc0] sm:$0xff]
    %v82 = vld [vmem:[%s2 + $0xc8] sm:$0xff]
    %v83 = vld [vmem:[%s2 + $0xd0] sm:$0xff]
    %v84 = vld [vmem:[%s2 + $0xd8] sm:$0xff]
    %v85 = vld [vmem:[%s2 + $0xe0] sm:$0xff]
    %v86 = vld [vmem:[%s2 + $0xe8] sm:$0xff]
    %v87 = vld [vmem:[%s2 + $0xf0] sm:$0xff]
    %v88 = vld [vmem:[%s2 + $0xf8] sm:$0xff]
    %90 = vset.pattern.permute.xlu0 0
    %91 = vperm.xlu0 %90, %v57
    %v92 = vpop.permute.xlu0 %91
    %95 = vset.pattern.permute.xlu0 0
    %96 = vperm.xlu0 %95, %v58
    %v97 = vpop.permute.xlu0 %96
    %100 = vset.pattern.permute.xlu0 0
    %101 = vperm.xlu0 %100, %v59
    %v102 = vpop.permute.xlu0 %101
    %105 = vset.pattern.permute.xlu0 0
    %106 = vperm.xlu0 %105, %v60
    %v107 = vpop.permute.xlu0 %106
    %110 = vset.pattern.permute.xlu0 0
    %111 = vperm.xlu0 %110, %v61
    %v112 = vpop.permute.xlu0 %111
    %115 = vset.pattern.permute.xlu0 0
    %116 = vperm.xlu0 %115, %v62
    %v117 = vpop.permute.xlu0 %116
    %120 = vset.pattern.permute.xlu0 0
    %121 = vperm.xlu0 %120, %v63
    %v122 = vpop.permute.xlu0 %121
    %125 = vset.pattern.permute.xlu0 0
    %126 = vperm.xlu0 %125, %v64
    %v127 = vpop.permute.xlu0 %126
    %130 = vset.pattern.permute.xlu0 0
    %131 = vperm.xlu0 %130, %v65
    %v132 = vpop.permute.xlu0 %131
    %135 = vset.pattern.permute.xlu0 0
    %136 = vperm.xlu0 %135, %v66
    %v137 = vpop.permute.xlu0 %136
    %140 = vset.pattern.permute.xlu0 0
    %141 = vperm.xlu0 %140, %v67
    %v142 = vpop.permute.xlu0 %141
    %145 = vset.pattern.permute.xlu0 0
    %146 = vperm.xlu0 %145, %v68
    %v147 = vpop.permute.xlu0 %146
    %150 = vset.pattern.permute.xlu0 0
    %151 = vperm.xlu0 %150, %v69
    %v152 = vpop.permute.xlu0 %151
    %155 = vset.pattern.permute.xlu0 0
    %156 = vperm.xlu0 %155, %v70
    %v157 = vpop.permute.xlu0 %156
    %160 = vset.pattern.permute.xlu0 0
    %161 = vperm.xlu0 %160, %v71
    %v162 = vpop.permute.xlu0 %161
    %165 = vset.pattern.permute.xlu0 0
    %166 = vperm.xlu0 %165, %v72
    %v167 = vpop.permute.xlu0 %166
    %170 = vset.pattern.permute.xlu0 0
    %171 = vperm.xlu0 %170, %v73
    %v172 = vpop.permute.xlu0 %171
    %175 = vset.pattern.permute.xlu0 0
    %176 = vperm.xlu0 %175, %v74
    %v177 = vpop.permute.xlu0 %176
    %180 = vset.pattern.permute.xlu0 0
    %181 = vperm.xlu0 %180, %v75
    %v182 = vpop.permute.xlu0 %181
    %185 = vset.pattern.permute.xlu0 0
    %186 = vperm.xlu0 %185, %v76
    %v187 = vpop.permute.xlu0 %186
    %190 = vset.pattern.permute.xlu0 0
    %191 = vperm.xlu0 %190, %v77
    %v192 = vpop.permute.xlu0 %191
    %195 = vset.pattern.permute.xlu0 0
    %196 = vperm.xlu0 %195, %v78
    %v197 = vpop.permute.xlu0 %196
    %200 = vset.pattern.permute.xlu0 0
    %201 = vperm.xlu0 %200, %v79
    %v202 = vpop.permute.xlu0 %201
    %205 = vset.pattern.permute.xlu0 0
    %206 = vperm.xlu0 %205, %v80
    %v207 = vpop.permute.xlu0 %206
    %210 = vset.pattern.permute.xlu0 0
    %211 = vperm.xlu0 %210, %v81
    %v212 = vpop.permute.xlu0 %211
    %215 = vset.pattern.permute.xlu0 0
    %216 = vperm.xlu0 %215, %v82
    %v217 = vpop.permute.xlu0 %216
    %220 = vset.pattern.permute.xlu0 0
    %221 = vperm.xlu0 %220, %v83
    %v222 = vpop.permute.xlu0 %221
    %225 = vset.pattern.permute.xlu0 0
    %226 = vperm.xlu0 %225, %v84
    %v227 = vpop.permute.xlu0 %226
    %230 = vset.pattern.permute.xlu0 0
    %231 = vperm.xlu0 %230, %v85
    %v232 = vpop.permute.xlu0 %231
    %235 = vset.pattern.permute.xlu0 0
    %236 = vperm.xlu0 %235, %v86
    %v237 = vpop.permute.xlu0 %236
    %240 = vset.pattern.permute.xlu0 0
    %241 = vperm.xlu0 %240, %v87
    %v242 = vpop.permute.xlu0 %241
    %245 = vset.pattern.permute.xlu0 0
    %246 = vperm.xlu0 %245, %v88
    %v247 = vpop.permute.xlu0 %246
    %vm249 = vcmask 64512
    %v251 = vsel %vm249, %v23, 0
    %v254 = vsel %vm249, %v24, 0
    %v257 = vsel %vm249, %v25, 0
    %v260 = vsel %vm249, %v26, 0
    %v263 = vsel %vm249, %v27, 0
    %v266 = vsel %vm249, %v28, 0
    %v269 = vsel %vm249, %v29, 0
    %v272 = vsel %vm249, %v30, 0
    %v275 = vsel %vm249, %v31, 0
    %v278 = vsel %vm249, %v32, 0
    %v281 = vsel %vm249, %v33, 0
    %v284 = vsel %vm249, %v34, 0
    %v287 = vsel %vm249, %v35, 0
    %v290 = vsel %vm249, %v36, 0
    %v293 = vsel %vm249, %v37, 0
    %v296 = vsel %vm249, %v38, 0
    %v299 = vsel %vm249, %v39, 0
    %v302 = vsel %vm249, %v40, 0
    %v305 = vsel %vm249, %v41, 0
    %v308 = vsel %vm249, %v42, 0
    %v311 = vsel %vm249, %v43, 0
    %v314 = vsel %vm249, %v44, 0
    %v317 = vsel %vm249, %v45, 0
    %v320 = vsel %vm249, %v46, 0
    %v323 = vsel %vm249, %v47, 0
    %v326 = vsel %vm249, %v48, 0
    %v329 = vsel %vm249, %v49, 0
    %v332 = vsel %vm249, %v50, 0
    %v335 = vsel %vm249, %v51, 0
    %v338 = vsel %vm249, %v52, 0
    %v341 = vsel %vm249, %v53, 0
    %v344 = vsel %vm249, %v54, 0
    %346 = vmatprep.subr.mxu0 %v56
    %347 = vmatpush1.msra.mxu0 %v55
    %348 = vmatprep.subr.mxu0 0.0
    %349 = vmatpush1.msra.mxu0 0.0
    %350 = vmatprep.subr.mxu0 0.0
    %351 = vmatpush1.msra.mxu0 0.0
    %352 = vmatprep.subr.mxu0 0.0
    %353 = vmatpush1.msra.mxu0 0.0
    %354 = vmatprep.subr.mxu0 0.0
    %355 = vmatpush1.msra.mxu0 0.0
    %356 = vmatprep.subr.mxu0 0.0
    %357 = vmatpush1.msra.mxu0 0.0
    %358 = vmatprep.subr.mxu0 0.0
    %359 = vmatpush1.msra.mxu0 0.0
    %360 = vmatprep.subr.mxu0 0.0
    %361 = vmatpush1.msra.mxu0 0.0
    %362 = vmatprep.subr.mxu0 0.0
    %363 = vmatpush1.msra.mxu0 0.0
    %364 = vmatprep.subr.mxu0 0.0
    %365 = vmatpush1.msra.mxu0 0.0
    %366 = vmatprep.subr.mxu0 0.0
    %367 = vmatpush1.msra.mxu0 0.0
    %368 = vmatprep.subr.mxu0 0.0
    %369 = vmatpush1.msra.mxu0 0.0
    %370 = vmatprep.subr.mxu0 0.0
    %371 = vmatpush1.msra.mxu0 0.0
    %372 = vmatprep.subr.mxu0 0.0
    %373 = vmatpush1.msra.mxu0 0.0
    %374 = vmatprep.subr.mxu0 0.0
    %375 = vmatpush1.msra.mxu0 0.0
    %376 = vmatprep.subr.mxu0 0.0
    %377 = vmatpush1.msra.mxu0 0.0
    %378 = vmatprep.subr.mxu0 0.0
    %379 = vmatpush1.msra.mxu0 0.0
    %380 = vmatprep.subr.mxu0 0.0
    %381 = vmatpush1.msra.mxu0 0.0
    %382 = vmatprep.subr.mxu0 0.0
    %383 = vmatpush1.msra.mxu0 0.0
    %384 = vmatprep.subr.mxu0 0.0
    %385 = vmatpush1.msra.mxu0 0.0
    %386 = vmatprep.subr.mxu0 0.0
    %387 = vmatpush1.msra.mxu0 0.0
    %388 = vmatprep.subr.mxu0 0.0
    %389 = vmatpush1.msra.mxu0 0.0
    %390 = vmatprep.subr.mxu0 0.0
    %391 = vmatpush1.msra.mxu0 0.0
    %392 = vmatprep.subr.mxu0 0.0
    %393 = vmatpush1.msra.mxu0 0.0
    %394 = vmatprep.subr.mxu0 0.0
    %395 = vmatpush1.msra.mxu0 0.0
    %396 = vmatprep.subr.mxu0 0.0
    %397 = vmatpush1.msra.mxu0 0.0
    %398 = vmatprep.subr.mxu0 0.0
    %399 = vmatpush1.msra.mxu0 0.0
    %400 = vmatprep.subr.mxu0 0.0
    %401 = vmatpush1.msra.mxu0 0.0
    %402 = vmatprep.subr.mxu0 0.0
    %403 = vmatpush1.msra.mxu0 0.0
    %404 = vmatprep.subr.mxu0 0.0
    %405 = vmatpush1.msra.mxu0 0.0
    %406 = vmatprep.subr.mxu0 0.0
    %407 = vmatpush1.msra.mxu0 0.0
    %408 = vmatprep.subr.mxu0 0.0
    %409 = vmatpush1.msra.mxu0 0.0
    %410 = vmatprep.mubr.f32.mxu0 0.0
    %411 = vmatmul.mubr.f32.gmra.mrb[0].mxu0 %v251
    %v412 = vpop.f32.mrb[0].mxu0
    %v413 = vadd.f32 %v92, %v412
    %v414 = vpop.f32.mrb[0].mxu0
    %v415 = vadd.f32 %v92, %v414
    %416 = vmatprep.mubr.f32.mxu0 0.0
    %417 = vmatmul.mubr.f32.gmra.mrb[0].mxu0 %v254
    %v418 = vpop.f32.mrb[0].mxu0
    %v419 = vadd.f32 %v97, %v418
    %v420 = vpop.f32.mrb[0].mxu0
    %v421 = vadd.f32 %v97, %v420
    %422 = vmatprep.mubr.f32.mxu0 0.0
    %423 = vmatmul.mubr.f32.gmra.mrb[0].mxu0 %v257
    %v424 = vpop.f32.mrb[0].mxu0
    %v425 = vadd.f32 %v102, %v424
    %v426 = vpop.f32.mrb[0].mxu0
    %v427 = vadd.f32 %v102, %v426
    %428 = vmatprep.mubr.f32.mxu0 0.0
    %429 = vmatmul.mubr.f32.gmra.mrb[0].mxu0 %v260
    %v430 = vpop.f32.mrb[0].mxu0
    %v431 = vadd.f32 %v107, %v430
    %v432 = vpop.f32.mrb[0].mxu0
    %v433 = vadd.f32 %v107, %v432
    %434 = vmatprep.mubr.f32.mxu0 0.0
    %435 = vmatmul.mubr.f32.gmra.mrb[0].mxu0 %v263
    %v436 = vpop.f32.mrb[0].mxu0
    %v437 = vadd.f32 %v112, %v436
    %v438 = vpop.f32.mrb[0].mxu0
    %v439 = vadd.f32 %v112, %v438
    %440 = vmatprep.mubr.f32.mxu0 0.0
    %441 = vmatmul.mubr.f32.gmra.mrb[0].mxu0 %v266
    %v442 = vpop.f32.mrb[0].mxu0
    %v443 = vadd.f32 %v117, %v442
    %v444 = vpop.f32.mrb[0].mxu0
    %v445 = vadd.f32 %v117, %v444
    %446 = vmatprep.mubr.f32.mxu0 0.0
    %447 = vmatmul.mubr.f32.gmra.mrb[0].mxu0 %v269
    %v448 = vpop.f32.mrb[0].mxu0
    %v449 = vadd.f32 %v122, %v448
    %v450 = vpop.f32.mrb[0].mxu0
    %v451 = vadd.f32 %v122, %v450
    %452 = vmatprep.mubr.f32.mxu0 0.0
    %453 = vmatmul.mubr.f32.gmra.mrb[0].mxu0 %v272
    %v454 = vpop.f32.mrb[0].mxu0
    %v455 = vadd.f32 %v127, %v454
    %v456 = vpop.f32.mrb[0].mxu0
    %v457 = vadd.f32 %v127, %v456
    %458 = vmatprep.mubr.f32.mxu0 0.0
    %459 = vmatmul.mubr.f32.gmra.mrb[0].mxu0 %v275
    %v460 = vpop.f32.mrb[0].mxu0
    %v461 = vadd.f32 %v132, %v460
    %v462 = vpop.f32.mrb[0].mxu0
    %v463 = vadd.f32 %v132, %v462
    %464 = vmatprep.mubr.f32.mxu0 0.0
    %465 = vmatmul.mubr.f32.gmra.mrb[0].mxu0 %v278
    %v466 = vpop.f32.mrb[0].mxu0
    %v467 = vadd.f32 %v137, %v466
    %v468 = vpop.f32.mrb[0].mxu0
    %v469 = vadd.f32 %v137, %v468
    %470 = vmatprep.mubr.f32.mxu0 0.0
    %471 = vmatmul.mubr.f32.gmra.mrb[0].mxu0 %v281
    %v472 = vpop.f32.mrb[0].mxu0
    %v473 = vadd.f32 %v142, %v472
    %v474 = vpop.f32.mrb[0].mxu0
    %v475 = vadd.f32 %v142, %v474
    %476 = vmatprep.mubr.f32.mxu0 0.0
    %477 = vmatmul.mubr.f32.gmra.mrb[0].mxu0 %v284
    %v478 = vpop.f32.mrb[0].mxu0
    %v479 = vadd.f32 %v147, %v478
    %v480 = vpop.f32.mrb[0].mxu0
    %v481 = vadd.f32 %v147, %v480
    %482 = vmatprep.mubr.f32.mxu0 0.0
    %483 = vmatmul.mubr.f32.gmra.mrb[0].mxu0 %v287
    %v484 = vpop.f32.mrb[0].mxu0
    %v485 = vadd.f32 %v152, %v484
    %v486 = vpop.f32.mrb[0].mxu0
    %v487 = vadd.f32 %v152, %v486
    %488 = vmatprep.mubr.f32.mxu0 0.0
    %489 = vmatmul.mubr.f32.gmra.mrb[0].mxu0 %v290
    %v490 = vpop.f32.mrb[0].mxu0
    %v491 = vadd.f32 %v157, %v490
    %v492 = vpop.f32.mrb[0].mxu0
    %v493 = vadd.f32 %v157, %v492
    %494 = vmatprep.mubr.f32.mxu0 0.0
    %495 = vmatmul.mubr.f32.gmra.mrb[0].mxu0 %v293
    %v496 = vpop.f32.mrb[0].mxu0
    %v497 = vadd.f32 %v162, %v496
    %v498 = vpop.f32.mrb[0].mxu0
    %v499 = vadd.f32 %v162, %v498
    %500 = vmatprep.mubr.f32.mxu0 0.0
    %501 = vmatmul.mubr.f32.gmra.mrb[0].mxu0 %v296
    %v502 = vpop.f32.mrb[0].mxu0
    %v503 = vadd.f32 %v167, %v502
    %v504 = vpop.f32.mrb[0].mxu0
    %v505 = vadd.f32 %v167, %v504
    %506 = vmatprep.mubr.f32.mxu0 0.0
    %507 = vmatmul.mubr.f32.gmra.mrb[0].mxu0 %v299
    %v508 = vpop.f32.mrb[0].mxu0
    %v509 = vadd.f32 %v172, %v508
    %v510 = vpop.f32.mrb[0].mxu0
    %v511 = vadd.f32 %v172, %v510
    %512 = vmatprep.mubr.f32.mxu0 0.0
    %513 = vmatmul.mubr.f32.gmra.mrb[0].mxu0 %v302
    %v514 = vpop.f32.mrb[0].mxu0
    %v515 = vadd.f32 %v177, %v514
    %v516 = vpop.f32.mrb[0].mxu0
    %v517 = vadd.f32 %v177, %v516
    %518 = vmatprep.mubr.f32.mxu0 0.0
    %519 = vmatmul.mubr.f32.gmra.mrb[0].mxu0 %v305
    %v520 = vpop.f32.mrb[0].mxu0
    %v521 = vadd.f32 %v182, %v520
    %v522 = vpop.f32.mrb[0].mxu0
    %v523 = vadd.f32 %v182, %v522
    %524 = vmatprep.mubr.f32.mxu0 0.0
    %525 = vmatmul.mubr.f32.gmra.mrb[0].mxu0 %v308
    %v526 = vpop.f32.mrb[0].mxu0
    %v527 = vadd.f32 %v187, %v526
    %v528 = vpop.f32.mrb[0].mxu0
    %v529 = vadd.f32 %v187, %v528
    %530 = vmatprep.mubr.f32.mxu0 0.0
    %531 = vmatmul.mubr.f32.gmra.mrb[0].mxu0 %v311
    %v532 = vpop.f32.mrb[0].mxu0
    %v533 = vadd.f32 %v192, %v532
    %v534 = vpop.f32.mrb[0].mxu0
    %v535 = vadd.f32 %v192, %v534
    %536 = vmatprep.mubr.f32.mxu0 0.0
    %537 = vmatmul.mubr.f32.gmra.mrb[0].mxu0 %v314
    %v538 = vpop.f32.mrb[0].mxu0
    %v539 = vadd.f32 %v197, %v538
    %v540 = vpop.f32.mrb[0].mxu0
    %v541 = vadd.f32 %v197, %v540
    %542 = vmatprep.mubr.f32.mxu0 0.0
    %543 = vmatmul.mubr.f32.gmra.mrb[0].mxu0 %v317
    %v544 = vpop.f32.mrb[0].mxu0
    %v545 = vadd.f32 %v202, %v544
    %v546 = vpop.f32.mrb[0].mxu0
    %v547 = vadd.f32 %v202, %v546
    %548 = vmatprep.mubr.f32.mxu0 0.0
    %549 = vmatmul.mubr.f32.gmra.mrb[0].mxu0 %v320
    %v550 = vpop.f32.mrb[0].mxu0
    %v551 = vadd.f32 %v207, %v550
    %v552 = vpop.f32.mrb[0].mxu0
    %v553 = vadd.f32 %v207, %v552
    %554 = vmatprep.mubr.f32.mxu0 0.0
    %555 = vmatmul.mubr.f32.gmra.mrb[0].mxu0 %v323
    %v556 = vpop.f32.mrb[0].mxu0
    %v557 = vadd.f32 %v212, %v556
    %v558 = vpop.f32.mrb[0].mxu0
    %v559 = vadd.f32 %v212, %v558
    %560 = vmatprep.mubr.f32.mxu0 0.0
    %561 = vmatmul.mubr.f32.gmra.mrb[0].mxu0 %v326
    %v562 = vpop.f32.mrb[0].mxu0
    %v563 = vadd.f32 %v217, %v562
    %v564 = vpop.f32.mrb[0].mxu0
    %v565 = vadd.f32 %v217, %v564
    %566 = vmatprep.mubr.f32.mxu0 0.0
    %567 = vmatmul.mubr.f32.gmra.mrb[0].mxu0 %v329
    %v568 = vpop.f32.mrb[0].mxu0
    %v569 = vadd.f32 %v222, %v568
    %v570 = vpop.f32.mrb[0].mxu0
    %v571 = vadd.f32 %v222, %v570
    %572 = vmatprep.mubr.f32.mxu0 0.0
    %573 = vmatmul.mubr.f32.gmra.mrb[0].mxu0 %v332
    %v574 = vpop.f32.mrb[0].mxu0
    %v575 = vadd.f32 %v227, %v574
    %v576 = vpop.f32.mrb[0].mxu0
    %v577 = vadd.f32 %v227, %v576
    %578 = vmatprep.mubr.f32.mxu0 0.0
    %579 = vmatmul.mubr.f32.gmra.mrb[0].mxu0 %v335
    %v580 = vpop.f32.mrb[0].mxu0
    %v581 = vadd.f32 %v232, %v580
    %v582 = vpop.f32.mrb[0].mxu0
    %v583 = vadd.f32 %v232, %v582
    %584 = vmatprep.mubr.f32.mxu0 0.0
    %585 = vmatmul.mubr.f32.gmra.mrb[0].mxu0 %v338
    %v586 = vpop.f32.mrb[0].mxu0
    %v587 = vadd.f32 %v237, %v586
    %v588 = vpop.f32.mrb[0].mxu0
    %v589 = vadd.f32 %v237, %v588
    %590 = vmatprep.mubr.f32.mxu0 0.0
    %591 = vmatmul.mubr.f32.gmra.mrb[0].mxu0 %v341
    %v592 = vpop.f32.mrb[0].mxu0
    %v593 = vadd.f32 %v242, %v592
    %v594 = vpop.f32.mrb[0].mxu0
    %v595 = vadd.f32 %v242, %v594
    %596 = vmatprep.mubr.f32.mxu0 0.0
    %597 = vmatmul.mubr.f32.gmra.mrb[0].mxu0 %v344
    %v598 = vpop.f32.mrb[0].mxu0
    %v599 = vadd.f32 %v247, %v598
    %v600 = vpop.f32.mrb[0].mxu0
    %v601 = vadd.f32 %v247, %v600
    %602 = vdwg.mxu0
    %v603 = vxor.u32 %v413, 2147483648
    %v604 = vxor.u32 %v415, 2147483648
    %v605 = vxor.u32 %v419, 2147483648
    %v606 = vxor.u32 %v421, 2147483648
    %v607 = vxor.u32 %v425, 2147483648
    %v608 = vxor.u32 %v427, 2147483648
    %v609 = vxor.u32 %v431, 2147483648
    %v610 = vxor.u32 %v433, 2147483648
    %v611 = vxor.u32 %v437, 2147483648
    %v612 = vxor.u32 %v439, 2147483648
    %v613 = vxor.u32 %v443, 2147483648
    %v614 = vxor.u32 %v445, 2147483648
    %v615 = vxor.u32 %v449, 2147483648
    %v616 = vxor.u32 %v451, 2147483648
    %v617 = vxor.u32 %v455, 2147483648
    %v618 = vxor.u32 %v457, 2147483648
    %v619 = vxor.u32 %v461, 2147483648
    %v620 = vxor.u32 %v463, 2147483648
    %v621 = vxor.u32 %v467, 2147483648
    %v622 = vxor.u32 %v469, 2147483648
    %v623 = vxor.u32 %v473, 2147483648
    %v624 = vxor.u32 %v475, 2147483648
    %v625 = vxor.u32 %v479, 2147483648
    %v626 = vxor.u32 %v481, 2147483648
    %v627 = vxor.u32 %v485, 2147483648
    %v628 = vxor.u32 %v487, 2147483648
    %v629 = vxor.u32 %v491, 2147483648
    %v630 = vxor.u32 %v493, 2147483648
    %v631 = vxor.u32 %v497, 2147483648
    %v632 = vxor.u32 %v499, 2147483648
    %v633 = vxor.u32 %v503, 2147483648
    %v634 = vxor.u32 %v505, 2147483648
    %v635 = vxor.u32 %v509, 2147483648
    %v636 = vxor.u32 %v511, 2147483648
    %v637 = vxor.u32 %v515, 2147483648
    %v638 = vxor.u32 %v517, 2147483648
    %v639 = vxor.u32 %v521, 2147483648
    %v640 = vxor.u32 %v523, 2147483648
    %v641 = vxor.u32 %v527, 2147483648
    %v642 = vxor.u32 %v529, 2147483648
    %v643 = vxor.u32 %v533, 2147483648
    %v644 = vxor.u32 %v535, 2147483648
    %v645 = vxor.u32 %v539, 2147483648
    %v646 = vxor.u32 %v541, 2147483648
    %v647 = vxor.u32 %v545, 2147483648
    %v648 = vxor.u32 %v547, 2147483648
    %v649 = vxor.u32 %v551, 2147483648
    %v650 = vxor.u32 %v553, 2147483648
    %v651 = vxor.u32 %v557, 2147483648
    %v652 = vxor.u32 %v559, 2147483648
    %v653 = vxor.u32 %v563, 2147483648
    %v654 = vxor.u32 %v565, 2147483648
    %v655 = vxor.u32 %v569, 2147483648
    %v656 = vxor.u32 %v571, 2147483648
    %v657 = vxor.u32 %v575, 2147483648
    %v658 = vxor.u32 %v577, 2147483648
    %v659 = vxor.u32 %v581, 2147483648
    %v660 = vxor.u32 %v583, 2147483648
    %v661 = vxor.u32 %v587, 2147483648
    %v662 = vxor.u32 %v589, 2147483648
    %v663 = vxor.u32 %v593, 2147483648
    %v664 = vxor.u32 %v595, 2147483648
    %v665 = vxor.u32 %v599, 2147483648
    %v666 = vxor.u32 %v601, 2147483648
    %v667 = vmul.f32 %v603, 1.442695
    %v668 = vpow.pop %v667
    %v669 = vmul.f32 %v604, 1.442695
    %v670 = vpow.pop %v669
    %v671 = vmul.f32 %v605, 1.442695
    %v672 = vpow.pop %v671
    %v673 = vmul.f32 %v606, 1.442695
    %v674 = vpow.pop %v673
    %v675 = vmul.f32 %v607, 1.442695
    %v676 = vpow.pop %v675
    %v677 = vmul.f32 %v608, 1.442695
    %v678 = vpow.pop %v677
    %v679 = vmul.f32 %v609, 1.442695
    %v680 = vpow.pop %v679
    %v681 = vmul.f32 %v610, 1.442695
    %v682 = vpow.pop %v681
    %v683 = vmul.f32 %v611, 1.442695
    %v684 = vpow.pop %v683
    %v685 = vmul.f32 %v612, 1.442695
    %v686 = vpow.pop %v685
    %v687 = vmul.f32 %v613, 1.442695
    %v688 = vpow.pop %v687
    %v689 = vmul.f32 %v614, 1.442695
    %v690 = vpow.pop %v689
    %v691 = vmul.f32 %v615, 1.442695
    %v692 = vpow.pop %v691
    %v693 = vmul.f32 %v616, 1.442695
    %v694 = vpow.pop %v693
    %v695 = vmul.f32 %v617, 1.442695
    %v696 = vpow.pop %v695
    %v697 = vmul.f32 %v618, 1.442695
    %v698 = vpow.pop %v697
    %v699 = vmul.f32 %v619, 1.442695
    %v700 = vpow.pop %v699
    %v701 = vmul.f32 %v620, 1.442695
    %v702 = vpow.pop %v701
    %v703 = vmul.f32 %v621, 1.442695
    %v704 = vpow.pop %v703
    %v705 = vmul.f32 %v622, 1.442695
    %v706 = vpow.pop %v705
    %v707 = vmul.f32 %v623, 1.442695
    %v708 = vpow.pop %v707
    %v709 = vmul.f32 %v624, 1.442695
    %v710 = vpow.pop %v709
    %v711 = vmul.f32 %v625, 1.442695
    %v712 = vpow.pop %v711
    %v713 = vmul.f32 %v626, 1.442695
    %v714 = vpow.pop %v713
    %v715 = vmul.f32 %v627, 1.442695
    %v716 = vpow.pop %v715
    %v717 = vmul.f32 %v628, 1.442695
    %v718 = vpow.pop %v717
    %v719 = vmul.f32 %v629, 1.442695
    %v720 = vpow.pop %v719
    %v721 = vmul.f32 %v630, 1.442695
    %v722 = vpow.pop %v721
    %v723 = vmul.f32 %v631, 1.442695
    %v724 = vpow.pop %v723
    %v725 = vmul.f32 %v632, 1.442695
    %v726 = vpow.pop %v725
    %v727 = vmul.f32 %v633, 1.442695
    %v728 = vpow.pop %v727
    %v729 = vmul.f32 %v634, 1.442695
    %v730 = vpow.pop %v729
    %v731 = vmul.f32 %v635, 1.442695
    %v732 = vpow.pop %v731
    %v733 = vmul.f32 %v636, 1.442695
    %v734 = vpow.pop %v733
    %v735 = vmul.f32 %v637, 1.442695
    %v736 = vpow.pop %v735
    %v737 = vmul.f32 %v638, 1.442695
    %v738 = vpow.pop %v737
    %v739 = vmul.f32 %v639, 1.442695
    %v740 = vpow.pop %v739
    %v741 = vmul.f32 %v640, 1.442695
    %v742 = vpow.pop %v741
    %v743 = vmul.f32 %v641, 1.442695
    %v744 = vpow.pop %v743
    %v745 = vmul.f32 %v642, 1.442695
    %v746 = vpow.pop %v745
    %v747 = vmul.f32 %v643, 1.442695
    %v748 = vpow.pop %v747
    %v749 = vmul.f32 %v644, 1.442695
    %v750 = vpow.pop %v749
    %v751 = vmul.f32 %v645, 1.442695
    %v752 = vpow.pop %v751
    %v753 = vmul.f32 %v646, 1.442695
    %v754 = vpow.pop %v753
    %v755 = vmul.f32 %v647, 1.442695
    %v756 = vpow.pop %v755
    %v757 = vmul.f32 %v648, 1.442695
    %v758 = vpow.pop %v757
    %v759 = vmul.f32 %v649, 1.442695
    %v760 = vpow.pop %v759
    %v761 = vmul.f32 %v650, 1.442695
    %v762 = vpow.pop %v761
    %v763 = vmul.f32 %v651, 1.442695
    %v764 = vpow.pop %v763
    %v765 = vmul.f32 %v652, 1.442695
    %v766 = vpow.pop %v765
    %v767 = vmul.f32 %v653, 1.442695
    %v768 = vpow.pop %v767
    %v769 = vmul.f32 %v654, 1.442695
    %v770 = vpow.pop %v769
    %v771 = vmul.f32 %v655, 1.442695
    %v772 = vpow.pop %v771
    %v773 = vmul.f32 %v656, 1.442695
    %v774 = vpow.pop %v773
    %v775 = vmul.f32 %v657, 1.442695
    %v776 = vpow.pop %v775
    %v777 = vmul.f32 %v658, 1.442695
    %v778 = vpow.pop %v777
    %v779 = vmul.f32 %v659, 1.442695
    %v780 = vpow.pop %v779
    %v781 = vmul.f32 %v660, 1.442695
    %v782 = vpow.pop %v781
    %v783 = vmul.f32 %v661, 1.442695
    %v784 = vpow.pop %v783
    %v785 = vmul.f32 %v662, 1.442695
    %v786 = vpow.pop %v785
    %v787 = vmul.f32 %v663, 1.442695
    %v788 = vpow.pop %v787
    %v789 = vmul.f32 %v664, 1.442695
    %v790 = vpow.pop %v789
    %v791 = vmul.f32 %v665, 1.442695
    %v792 = vpow.pop %v791
    %v793 = vmul.f32 %v666, 1.442695
    %v794 = vpow.pop %v793
    %v795 = vadd.f32 %v668, 1.0
    %v796 = vadd.f32 %v670, 1.0
    %v797 = vadd.f32 %v672, 1.0
    %v798 = vadd.f32 %v674, 1.0
    %v799 = vadd.f32 %v676, 1.0
    %v800 = vadd.f32 %v678, 1.0
    %v801 = vadd.f32 %v680, 1.0
    %v802 = vadd.f32 %v682, 1.0
    %v803 = vadd.f32 %v684, 1.0
    %v804 = vadd.f32 %v686, 1.0
    %v805 = vadd.f32 %v688, 1.0
    %v806 = vadd.f32 %v690, 1.0
    %v807 = vadd.f32 %v692, 1.0
    %v808 = vadd.f32 %v694, 1.0
    %v809 = vadd.f32 %v696, 1.0
    %v810 = vadd.f32 %v698, 1.0
    %v811 = vadd.f32 %v700, 1.0
    %v812 = vadd.f32 %v702, 1.0
    %v813 = vadd.f32 %v704, 1.0
    %v814 = vadd.f32 %v706, 1.0
    %v815 = vadd.f32 %v708, 1.0
    %v816 = vadd.f32 %v710, 1.0
    %v817 = vadd.f32 %v712, 1.0
    %v818 = vadd.f32 %v714, 1.0
    %v819 = vadd.f32 %v716, 1.0
    %v820 = vadd.f32 %v718, 1.0
    %v821 = vadd.f32 %v720, 1.0
    %v822 = vadd.f32 %v722, 1.0
    %v823 = vadd.f32 %v724, 1.0
    %v824 = vadd.f32 %v726, 1.0
    %v825 = vadd.f32 %v728, 1.0
    %v826 = vadd.f32 %v730, 1.0
    %v827 = vadd.f32 %v732, 1.0
    %v828 = vadd.f32 %v734, 1.0
    %v829 = vadd.f32 %v736, 1.0
    %v830 = vadd.f32 %v738, 1.0
    %v831 = vadd.f32 %v740, 1.0
    %v832 = vadd.f32 %v742, 1.0
    %v833 = vadd.f32 %v744, 1.0
    %v834 = vadd.f32 %v746, 1.0
    %v835 = vadd.f32 %v748, 1.0
    %v836 = vadd.f32 %v750, 1.0
    %v837 = vadd.f32 %v752, 1.0
    %v838 = vadd.f32 %v754, 1.0
    %v839 = vadd.f32 %v756, 1.0
    %v840 = vadd.f32 %v758, 1.0
    %v841 = vadd.f32 %v760, 1.0
    %v842 = vadd.f32 %v762, 1.0
    %v843 = vadd.f32 %v764, 1.0
    %v844 = vadd.f32 %v766, 1.0
    %v845 = vadd.f32 %v768, 1.0
    %v846 = vadd.f32 %v770, 1.0
    %v847 = vadd.f32 %v772, 1.0
    %v848 = vadd.f32 %v774, 1.0
    %v849 = vadd.f32 %v776, 1.0
    %v850 = vadd.f32 %v778, 1.0
    %v851 = vadd.f32 %v780, 1.0
    %v852 = vadd.f32 %v782, 1.0
    %v853 = vadd.f32 %v784, 1.0
    %v854 = vadd.f32 %v786, 1.0
    %v855 = vadd.f32 %v788, 1.0
    %v856 = vadd.f32 %v790, 1.0
    %v857 = vadd.f32 %v792, 1.0
    %v858 = vadd.f32 %v794, 1.0
    %v859 = vrcp.pop %v795
    %v860 = vmul.f32 1.0, %v859
    %v861 = vrcp.pop %v796
    %v862 = vmul.f32 1.0, %v861
    %v863 = vrcp.pop %v797
    %v864 = vmul.f32 1.0, %v863
    %v865 = vrcp.pop %v798
    %v866 = vmul.f32 1.0, %v865
    %v867 = vrcp.pop %v799
    %v868 = vmul.f32 1.0, %v867
    %v869 = vrcp.pop %v800
    %v870 = vmul.f32 1.0, %v869
    %v871 = vrcp.pop %v801
    %v872 = vmul.f32 1.0, %v871
    %v873 = vrcp.pop %v802
    %v874 = vmul.f32 1.0, %v873
    %v875 = vrcp.pop %v803
    %v876 = vmul.f32 1.0, %v875
    %v877 = vrcp.pop %v804
    %v878 = vmul.f32 1.0, %v877
    %v879 = vrcp.pop %v805
    %v880 = vmul.f32 1.0, %v879
    %v881 = vrcp.pop %v806
    %v882 = vmul.f32 1.0, %v881
    %v883 = vrcp.pop %v807
    %v884 = vmul.f32 1.0, %v883
    %v885 = vrcp.pop %v808
    %v886 = vmul.f32 1.0, %v885
    %v887 = vrcp.pop %v809
    %v888 = vmul.f32 1.0, %v887
    %v889 = vrcp.pop %v810
    %v890 = vmul.f32 1.0, %v889
    %v891 = vrcp.pop %v811
    %v892 = vmul.f32 1.0, %v891
    %v893 = vrcp.pop %v812
    %v894 = vmul.f32 1.0, %v893
    %v895 = vrcp.pop %v813
    %v896 = vmul.f32 1.0, %v895
    %v897 = vrcp.pop %v814
    %v898 = vmul.f32 1.0, %v897
    %v899 = vrcp.pop %v815
    %v900 = vmul.f32 1.0, %v899
    %v901 = vrcp.pop %v816
    %v902 = vmul.f32 1.0, %v901
    %v903 = vrcp.pop %v817
    %v904 = vmul.f32 1.0, %v903
    %v905 = vrcp.pop %v818
    %v906 = vmul.f32 1.0, %v905
    %v907 = vrcp.pop %v819
    %v908 = vmul.f32 1.0, %v907
    %v909 = vrcp.pop %v820
    %v910 = vmul.f32 1.0, %v909
    %v911 = vrcp.pop %v821
    %v912 = vmul.f32 1.0, %v911
    %v913 = vrcp.pop %v822
    %v914 = vmul.f32 1.0, %v913
    %v915 = vrcp.pop %v823
    %v916 = vmul.f32 1.0, %v915
    %v917 = vrcp.pop %v824
    %v918 = vmul.f32 1.0, %v917
    %v919 = vrcp.pop %v825
    %v920 = vmul.f32 1.0, %v919
    %v921 = vrcp.pop %v826
    %v922 = vmul.f32 1.0, %v921
    %v923 = vrcp.pop %v827
    %v924 = vmul.f32 1.0, %v923
    %v925 = vrcp.pop %v828
    %v926 = vmul.f32 1.0, %v925
    %v927 = vrcp.pop %v829
    %v928 = vmul.f32 1.0, %v927
    %v929 = vrcp.pop %v830
    %v930 = vmul.f32 1.0, %v929
    %v931 = vrcp.pop %v831
    %v932 = vmul.f32 1.0, %v931
    %v933 = vrcp.pop %v832
    %v934 = vmul.f32 1.0, %v933
    %v935 = vrcp.pop %v833
    %v936 = vmul.f32 1.0, %v935
    %v937 = vrcp.pop %v834
    %v938 = vmul.f32 1.0, %v937
    %v939 = vrcp.pop %v835
    %v940 = vmul.f32 1.0, %v939
    %v941 = vrcp.pop %v836
    %v942 = vmul.f32 1.0, %v941
    %v943 = vrcp.pop %v837
    %v944 = vmul.f32 1.0, %v943
    %v945 = vrcp.pop %v838
    %v946 = vmul.f32 1.0, %v945
    %v947 = vrcp.pop %v839
    %v948 = vmul.f32 1.0, %v947
    %v949 = vrcp.pop %v840
    %v950 = vmul.f32 1.0, %v949
    %v951 = vrcp.pop %v841
    %v952 = vmul.f32 1.0, %v951
    %v953 = vrcp.pop %v842
    %v954 = vmul.f32 1.0, %v953
    %v955 = vrcp.pop %v843
    %v956 = vmul.f32 1.0, %v955
    %v957 = vrcp.pop %v844
    %v958 = vmul.f32 1.0, %v957
    %v959 = vrcp.pop %v845
    %v960 = vmul.f32 1.0, %v959
    %v961 = vrcp.pop %v846
    %v962 = vmul.f32 1.0, %v961
    %v963 = vrcp.pop %v847
    %v964 = vmul.f32 1.0, %v963
    %v965 = vrcp.pop %v848
    %v966 = vmul.f32 1.0, %v965
    %v967 = vrcp.pop %v849
    %v968 = vmul.f32 1.0, %v967
    %v969 = vrcp.pop %v850
    %v970 = vmul.f32 1.0, %v969
    %v971 = vrcp.pop %v851
    %v972 = vmul.f32 1.0, %v971
    %v973 = vrcp.pop %v852
    %v974 = vmul.f32 1.0, %v973
    %v975 = vrcp.pop %v853
    %v976 = vmul.f32 1.0, %v975
    %v977 = vrcp.pop %v854
    %v978 = vmul.f32 1.0, %v977
    %v979 = vrcp.pop %v855
    %v980 = vmul.f32 1.0, %v979
    %v981 = vrcp.pop %v856
    %v982 = vmul.f32 1.0, %v981
    %v983 = vrcp.pop %v857
    %v984 = vmul.f32 1.0, %v983
    %v985 = vrcp.pop %v858
    %v986 = vmul.f32 1.0, %v985
    %v987 = vld [vmem:[%s3] sm:$0x3]
    %v988 = vld [vmem:[#allocation2] sm:$0x1]
    %990 = vset.pattern.permute.xlu0 0
    %991 = vperm.xlu0 %990, %v988
    %v992 = vpop.permute.xlu0 %991
    %v994 = vlaneseq
    %v995 = vshrl.u32 %v994, 7
    %v996 = vsub.s32 0, %v995
    %v997 = vrot.slane %v992, %v996
    %v999 = vlaneseq
    %v1000 = vshrl.u32 %v999, 7
    %v1001 = vsub.s32 0, %v1000
    %v1002 = vrot.slane %v987, %v1001
    %v1003 = vlaneseq
    %v1004 = vshrl.u32 %v1003, 7
    %v1005 = vsub.s32 1, %v1004
    %v1006 = vrot.slane %v987, %v1005
    %1009 = vmatprep.subr.mxu0 %v862
    %1010 = vmatpush1.msra.mxu0 %v860
    %1011 = vmatprep.subr.mxu0 %v866
    %1012 = vmatpush1.msra.mxu0 %v864
    %1013 = vmatprep.subr.mxu0 %v870
    %1014 = vmatpush1.msra.mxu0 %v868
    %1015 = vmatprep.subr.mxu0 %v874
    %1016 = vmatpush1.msra.mxu0 %v872
    %1017 = vmatprep.subr.mxu0 %v878
    %1018 = vmatpush1.msra.mxu0 %v876
    %1019 = vmatprep.subr.mxu0 %v882
    %1020 = vmatpush1.msra.mxu0 %v880
    %1021 = vmatprep.subr.mxu0 %v886
    %1022 = vmatpush1.msra.mxu0 %v884
    %1023 = vmatprep.subr.mxu0 %v890
    %1024 = vmatpush1.msra.mxu0 %v888
    %1025 = vmatprep.subr.mxu0 %v894
    %1026 = vmatpush1.msra.mxu0 %v892
    %1027 = vmatprep.subr.mxu0 %v898
    %1028 = vmatpush1.msra.mxu0 %v896
    %1029 = vmatprep.subr.mxu0 %v902
    %1030 = vmatpush1.msra.mxu0 %v900
    %1031 = vmatprep.subr.mxu0 %v906
    %1032 = vmatpush1.msra.mxu0 %v904
    %1033 = vmatprep.subr.mxu0 %v910
    %1034 = vmatpush1.msra.mxu0 %v908
    %1035 = vmatprep.subr.mxu0 %v914
    %1036 = vmatpush1.msra.mxu0 %v912
    %1037 = vmatprep.subr.mxu0 %v918
    %1038 = vmatpush1.msra.mxu0 %v916
    %1039 = vmatprep.subr.mxu0 %v922
    %1040 = vmatpush1.msra.mxu0 %v920
    %1041 = vmatprep.subr.mxu0 %v926
    %1042 = vmatpush1.msra.mxu0 %v924
    %1043 = vmatprep.subr.mxu0 %v930
    %1044 = vmatpush1.msra.mxu0 %v928
    %1045 = vmatprep.subr.mxu0 %v934
    %1046 = vmatpush1.msra.mxu0 %v932
    %1047 = vmatprep.subr.mxu0 %v938
    %1048 = vmatpush1.msra.mxu0 %v936
    %1049 = vmatprep.subr.mxu0 %v942
    %1050 = vmatpush1.msra.mxu0 %v940
    %1051 = vmatprep.subr.mxu0 %v946
    %1052 = vmatpush1.msra.mxu0 %v944
    %1053 = vmatprep.subr.mxu0 %v950
    %1054 = vmatpush1.msra.mxu0 %v948
    %1055 = vmatprep.subr.mxu0 %v954
    %1056 = vmatpush1.msra.mxu0 %v952
    %1057 = vmatprep.subr.mxu0 %v958
    %1058 = vmatpush1.msra.mxu0 %v956
    %1059 = vmatprep.subr.mxu0 %v962
    %1060 = vmatpush1.msra.mxu0 %v960
    %1061 = vmatprep.subr.mxu0 %v966
    %1062 = vmatpush1.msra.mxu0 %v964
    %1063 = vmatprep.subr.mxu0 %v970
    %1064 = vmatpush1.msra.mxu0 %v968
    %1065 = vmatprep.subr.mxu0 %v974
    %1066 = vmatpush1.msra.mxu0 %v972
    %1067 = vmatprep.subr.mxu0 %v978
    %1068 = vmatpush1.msra.mxu0 %v976
    %1069 = vmatprep.subr.mxu0 %v982
    %1070 = vmatpush1.msra.mxu0 %v980
    %1071 = vmatprep.subr.mxu0 %v986
    %1072 = vmatpush1.msra.mxu0 %v984
    %1073 = vmatprep.mubr.f32.mxu0 %v1006
    %1074 = vmatmul.mubr.f32.gmra.mrb[0].mxu0 %v1002
    %v1075 = vpop.f32.mrb[0].mxu0
    %v1076 = vadd.f32 %v997, %v1075
    %v1077 = vpop.f32.mrb[0].mxu0
    %v1078 = vadd.f32 %v997, %v1077
    %1079 = vdwg.mxu0
    %v1082 = vcombine.low %v1076, %v1078
    %v1084 = vunpack.c.l.s4 1966171168
    %v1085 = vunpack.c.0.s8 %v1084
    %v1086 = vlaneseq
    %v1087 = vshrl.u32 %v1086, 7
    %v1088 = vsub.s32 %v1085, %v1087
    %v1089 = vrot.slane %v1082, %v1088
    %v1091 = vunpack.c.l.s4 1966171168
    %v1092 = vunpack.c.0.s8 %v1091
    %v1093 = vlaneseq
    %v1094 = vshrl.u32 %v1093, 7
    %v1095 = vsub.s32 %v1092, %v1094
    %v1096 = vrot.slane %v1089, %v1095
    %v1098 = vlaneseq
    %vm1099 = vcmp.ge.s32.totalorder %v1098, 0
    %vm1100 = vcmp.lt.s32.totalorder %v1098, 256
    %vm1101 = vmand %vm1099, %vm1100
    %1102 = vst.msk [vmem:[#allocation3] sm:$0x3] %vm1101, %v1096
    // Predicated region
    $region22: #{tpu_custom_call.1} parent=1 // pred_check
      _
    $region23: #{tpu_custom_call.1} parent=1 // pred_check_branch
      %1104 = sbr.rel (0) target = $region25
    $region24: #{tpu_custom_call.1} parent=1 // pred_region
      %s1106 = ssub.s32 32, 32
      %1107 = vsyncadd [#allocation4], %s1106
      %s1109 = sshll.u32 [#allocation3], 4
      %s1110 = int_to_ptr.vmem [resolvable:$true] %s1109
      %1112 = dma.vmem_to_hbm [thread:$0]  %s1110, 32, %s5, [#allocation4]
    $region25: #{tpu_custom_call.1} parent=1 // pred_fallthru
      _
    // Predicated region
    $region26: #{tpu_custom_call.1} parent=1 // pred_check
      _
    $region27: #{tpu_custom_call.1} parent=1 // pred_check_branch
      %1114 = sbr.rel (0) target = $region29
    $region28: #{tpu_custom_call.1} parent=1 // pred_region
      %1115 = dma.done [#allocation4], 32
    $region29: #{tpu_custom_call.1} parent=1 // pred_fallthru
      _
    %1116 = vsyncpa [#allocation4], 1

</llo_original>
